<compile_context>
chip_gen: v7x
topology: tpu7x:2x2x1
jax: 0.10.0
libtpu: 0.0.40
codegen_flags: <defaults>
</compile_context>

<pallas_src>
import functools

import jax
import jax.numpy as jnp
from jax import lax
from jax.experimental import pallas as pl
from jax.experimental.pallas import tpu as pltpu

_EPS = 1e-12                         # torch F.normalize default eps
_TARGET_TILE_BYTES = 4 * 1024 * 1024
_VMEM_LIMIT_BYTES = 32 * 1024 * 1024


def _round_up(x, m):
    return (x + m - 1) // m * m


def _sublane_multiple(dtype):
    """Native sublane packing quantum: 8 for 4-byte, 16 for 2-byte, 32 for 1-byte."""
    itemsize = jnp.dtype(dtype).itemsize
    return max(8, 32 // max(itemsize, 1))


def _rows_per_tile(n_rows, row_bytes, sub, target_tile_bytes):
    """Rows per grid step: multiple of `sub`, ~target_tile_bytes per input tile."""
    budget = max(sub, (target_tile_bytes // max(row_bytes, 1)) // sub * sub)
    return min(budget, _round_up(n_rows, sub))


# ---------------------------------------------------------------------------
# One kernel for all three distance types: emits a per-grid-step partial sum.
#   cosine: sum of per-row cosine similarities
#   mse   : sum of squared differences
#   l1    : sum of absolute differences
# ---------------------------------------------------------------------------
def _partial_sum_kernel(distance_type, za_ref, zb_ref, out_ref):
    a = za_ref[...].astype(jnp.float32)                    # (tb, D)
    b = zb_ref[...].astype(jnp.float32)                    # (tb, D)
    if distance_type == "cosine":
        eps2 = jnp.float32(_EPS * _EPS)
        dot_ab = jnp.sum(a * b, axis=-1, keepdims=True)    # (tb, 1)
        inv_a = lax.rsqrt(jnp.maximum(jnp.sum(a * a, axis=-1, keepdims=True), eps2))
        inv_b = lax.rsqrt(jnp.maximum(jnp.sum(b * b, axis=-1, keepdims=True), eps2))
        val = dot_ab * inv_a * inv_b                        # per-row cos sim
    elif distance_type == "mse":
        diff = a - b
        val = jnp.sum(diff * diff, axis=-1, keepdims=True)  # per-row SSE
    else:  # "l1"
        val = jnp.sum(jnp.abs(a - b), axis=-1, keepdims=True)
    # One partial sum per grid step; zero-padded rows contribute exactly 0.
    out_ref[...] = jnp.sum(val, axis=0, keepdims=True).reshape(1, 1, 1)


def _partial_sums(za, zb, distance_type, target_tile_bytes):
    d = za.shape[-1]
    za2 = za.reshape(-1, d)
    zb2 = zb.reshape(-1, d)
    n_rows = za2.shape[0]

    itemsize = jnp.dtype(za.dtype).itemsize
    sub = _sublane_multiple(za.dtype)
    tb = _rows_per_tile(n_rows, d * itemsize, sub, target_tile_bytes)
    n_pad = _round_up(n_rows, tb)
    if n_pad != n_rows:
        za2 = jnp.pad(za2, ((0, n_pad - n_rows), (0, 0)))
        zb2 = jnp.pad(zb2, ((0, n_pad - n_rows), (0, 0)))
    num_chunks = n_pad // tb

    partials = pl.pallas_call(
        functools.partial(_partial_sum_kernel, distance_type),
        out_shape=jax.ShapeDtypeStruct((num_chunks, 1, 1), jnp.float32),
        grid_spec=pltpu.PrefetchScalarGridSpec(
            num_scalar_prefetch=0,
            grid=(num_chunks,),
            in_specs=[
                pl.BlockSpec((tb, d), lambda i: (i, 0)),
                pl.BlockSpec((tb, d), lambda i: (i, 0)),
            ],
            out_specs=pl.BlockSpec((1, 1, 1), lambda i: (i, 0, 0)),
        ),
        compiler_params=pltpu.CompilerParams(
            dimension_semantics=("parallel",),
            vmem_limit_bytes=_VMEM_LIMIT_BYTES,
        ),
    )(za2, zb2)

    return jnp.sum(partials), n_rows


# ---------------------------------------------------------------------------
# public wrapper (mirrors AlignmentLoss.forward)
# ---------------------------------------------------------------------------
def alignment_loss(za, zb, distance_type="cosine", *,
                   target_tile_bytes=_TARGET_TILE_BYTES):
    """Pallas-TPU forward of AlignmentLoss(distance_type)(za, zb). Returns a JAX scalar."""
    if za.shape != zb.shape:
        raise ValueError(f"shape mismatch: {za.shape} vs {zb.shape}")
    if distance_type not in ("cosine", "mse", "l1"):
        raise ValueError(f"Unknown distance type: {distance_type}")

    total, n_rows = _partial_sums(za, zb, distance_type, target_tile_bytes)
    if distance_type == "cosine":
        return 1.0 - total / jnp.float32(n_rows)
    # mse / l1: mean over every element (n_rows * D elements)
    n_elem = n_rows * za.shape[-1]
    return total / jnp.float32(n_elem)


# ---------------------------------------------------------------------------
# pure-JAX reference for the correctness check
# ---------------------------------------------------------------------------
def _reference(za, zb, distance_type):
    za = za.astype(jnp.float32)
    zb = zb.astype(jnp.float32)
    if distance_type == "cosine":
        na = jnp.maximum(jnp.linalg.norm(za, axis=-1, keepdims=True), _EPS)
        nb = jnp.maximum(jnp.linalg.norm(zb, axis=-1, keepdims=True), _EPS)
        sim = jnp.sum((za / na) * (zb / nb), axis=-1)
        return 1.0 - jnp.mean(sim)
    if distance_type == "mse":
        return jnp.mean((za - zb) ** 2)
    if distance_type == "l1":
        return jnp.mean(jnp.abs(za - zb))
    raise ValueError(distance_type)


if __name__ == "__main__":
    B, S, SHARED_DIM = 2, 8, 32
    key = jax.random.PRNGKey(0)
    k1, k2 = jax.random.split(key)
    za = jax.random.normal(k1, (B, S, SHARED_DIM), dtype=jnp.float32)
    zb = jax.random.normal(k2, (B, S, SHARED_DIM), dtype=jnp.float32)

    loss_fn = jax.jit(alignment_loss, static_argnames=("distance_type",))

    for dist in ("cosine", "mse", "l1"):
        got = jax.block_until_ready(loss_fn(za, zb, distance_type=dist))
        want = _reference(za, zb, dist)
        assert abs(float(got) - float(want)) < 1e-5, (dist, float(got), float(want))

    # bf16 inputs halve HBM traffic for this bandwidth-bound loss; kernel
    # accumulates in f32, so the result stays close to the f32 reference.
    got_bf16 = jax.block_until_ready(
        loss_fn(za.astype(jnp.bfloat16), zb.astype(jnp.bfloat16),
                distance_type="cosine"))
    assert abs(float(got_bf16) - float(_reference(za, zb, "cosine"))) < 5e-2

    print("KERNEL_OK")
</pallas_src>

<mosaic_0001>
module attributes {stable_mosaic.version = 11 : i64} {
  func.func @_partial_sum_kernel(%arg0: i32, %arg1: memref<16x32xf32, #tpu.memory_space<vmem>>, %arg2: memref<16x32xf32, #tpu.memory_space<vmem>>, %arg3: memref<1x1x1xf32, #tpu.memory_space<vmem>>) attributes {dimension_semantics = [#tpu.dimension_semantics<parallel>], iteration_bounds = array<i64: 1>, scalar_prefetch = 0 : i64, scratch_operands = 0 : i64, tpu.core_type = #tpu.core_type<tc>, window_params = [{transform_indices = @transform_0, window_bounds = array<i64: 16, 32>}, {transform_indices = @transform_1, window_bounds = array<i64: 16, 32>}, {transform_indices = @transform_2, window_bounds = array<i64: 1, 1, 1>}]} {
    %c0 = arith.constant 0 : index
    %c0_0 = arith.constant 0 : index
    %0 = vector.load %arg1[%c0, %c0_0] : memref<16x32xf32, #tpu.memory_space<vmem>>, vector<16x32xf32>
    %c0_1 = arith.constant 0 : index
    %c0_2 = arith.constant 0 : index
    %1 = vector.load %arg2[%c0_1, %c0_2] : memref<16x32xf32, #tpu.memory_space<vmem>>, vector<16x32xf32>
    %2 = arith.mulf %0, %1 : vector<16x32xf32>
    %cst = arith.constant dense<0.000000e+00> : vector<16xf32>
    %3 = vector.multi_reduction <add>, %2, %cst [1] : vector<16x32xf32> to vector<16xf32>
    %4 = vector.shape_cast %3 : vector<16xf32> to vector<16x1xf32>
    %5 = arith.mulf %0, %0 : vector<16x32xf32>
    %cst_3 = arith.constant dense<0.000000e+00> : vector<16xf32>
    %6 = vector.multi_reduction <add>, %5, %cst_3 [1] : vector<16x32xf32> to vector<16xf32>
    %7 = vector.shape_cast %6 : vector<16xf32> to vector<16x1xf32>
    %cst_4 = arith.constant 1.000000e-24 : f32
    %8 = vector.broadcast %cst_4 : f32 to vector<16x1xf32>
    %9 = arith.maximumf %7, %8 : vector<16x1xf32>
    %10 = math.rsqrt %9 : vector<16x1xf32>
    %11 = arith.mulf %1, %1 : vector<16x32xf32>
    %cst_5 = arith.constant dense<0.000000e+00> : vector<16xf32>
    %12 = vector.multi_reduction <add>, %11, %cst_5 [1] : vector<16x32xf32> to vector<16xf32>
    %13 = vector.shape_cast %12 : vector<16xf32> to vector<16x1xf32>
    %cst_6 = arith.constant 1.000000e-24 : f32
    %14 = vector.broadcast %cst_6 : f32 to vector<16x1xf32>
    %15 = arith.maximumf %13, %14 : vector<16x1xf32>
    %16 = math.rsqrt %15 : vector<16x1xf32>
    %17 = arith.mulf %4, %10 : vector<16x1xf32>
    %18 = arith.mulf %17, %16 : vector<16x1xf32>
    %cst_7 = arith.constant dense<0.000000e+00> : vector<1xf32>
    %19 = vector.multi_reduction <add>, %18, %cst_7 [0] : vector<16x1xf32> to vector<1xf32>
    %20 = vector.shape_cast %19 : vector<1xf32> to vector<1x1xf32>
    %21 = vector.shape_cast %20 : vector<1x1xf32> to vector<1x1x1xf32>
    %c0_8 = arith.constant 0 : index
    %c0_9 = arith.constant 0 : index
    %c0_10 = arith.constant 0 : index
    %22 = vector.load %arg3[%c0_8, %c0_9, %c0_10] : memref<1x1x1xf32, #tpu.memory_space<vmem>>, vector<1x1x1xf32>
    tpu.vector_store %arg3[%c0_8, %c0_9, %c0_10], %21 {strides = array<i32>} : memref<1x1x1xf32, #tpu.memory_space<vmem>>, vector<1x1x1xf32>,
    return
  }
  func.func @transform_0(%arg0: i32) -> (i32, i32) {
    %c0_i32 = arith.constant 0 : i32
    %c0_i32_0 = arith.constant 0 : i32
    return %arg0, %c0_i32 : i32, i32
  }
  func.func @transform_1(%arg0: i32) -> (i32, i32) {
    %c0_i32 = arith.constant 0 : i32
    %c0_i32_0 = arith.constant 0 : i32
    return %arg0, %c0_i32 : i32, i32
  }
  func.func @transform_2(%arg0: i32) -> (i32, i32, i32) {
    %c0_i32 = arith.constant 0 : i32
    %c0_i32_0 = arith.constant 0 : i32
    %c0_i32_1 = arith.constant 0 : i32
    return %arg0, %c0_i32, %c0_i32_0 : i32, i32, i32
  }
}

</mosaic_0001>

<llo_original>
// kernel: alignment_loss.1
$region0: #{alignment_loss.1}
  #allocation0 [shape = 'u32[]', space=smem, size = 0x4, offset = 0x4, fixed_abs, tag = 'smem constant byte address 0x4 - core index']
  #allocation1 [shape = 'u32[144,128]{1,0:T(1,128)}', space=vmem, size = 0x12000, scoped, tag = 'internal scratch']
  %s0 = inlined_call_operand.hbm [shape: f32[16,32], index: 0, kind: input, shape index: {}]
  %s1 = inlined_call_operand.hbm [shape: f32[16,32], index: 1, kind: input, shape index: {}]
  %s2 = inlined_call_operand.hbm [shape: f32[1,1,1], index: 2, kind: output, shape index: {}]
  %s3 = sld [smem:[#allocation0]]
  $region26: #{alignment_loss.1} parent=0
    _
  %s5 = ssub.s32 1, %s3
  %s6 = scalar_select 0, %s5, %s3
  $region1: #{alignment_loss.1} parent=0
    #allocation2 [shape = 'u8[8192]{0}', space=vmem, size = 0x2000, scoped, tag = 'input window, operand 0, single buffered']
    #allocation3 [shape = 's32[1]{0}', space=sflag, size = 0x4, scoped, tag = 'scoped memory for alignment_loss.1']
    #allocation4 [shape = 's32[1]{0}', space=sflag, size = 0x4, scoped, tag = 'scoped memory for alignment_loss.1']
    #allocation5 [shape = 'u8[8192]{0}', space=vmem, size = 0x2000, scoped, tag = 'input window, operand 1, single buffered']
    #allocation6 [shape = 's32[1]{0}', space=sflag, size = 0x4, scoped, tag = 'scoped memory for alignment_loss.1']
    #allocation7 [shape = 'u8[512]{0}', space=vmem, size = 0x400, scoped, tag = 'output window, operand 0, single buffered']
    %7 = vsyncpa [#allocation3], 0
    %8 = vsyncpa [#allocation6], 0
    %9 = vsyncpa [#allocation4], 0
    // Predicated region
    $region2: #{alignment_loss.1} parent=1 // pred_check
      _
    $region3: #{alignment_loss.1} parent=1 // pred_check_branch
      %11 = sbr.rel (0) target = $region5
    $region4: #{alignment_loss.1} parent=1 // pred_region
      %s13 = ssub.s32 256, 256
      %14 = vsyncadd [#allocation3], %s13
      %s15 = sshll.u32 [#allocation2], 4
      %s16 = int_to_ptr.vmem [resolvable:$true] %s15
      %21 = dma.hbm_to_vmem [thread:$0]  %s0, 256, %s16, [#allocation3], 128, 128, 8
    $region5: #{alignment_loss.1} parent=1 // pred_fallthru
      _
    // Predicated region
    $region6: #{alignment_loss.1} parent=1 // pred_check
      _
    $region7: #{alignment_loss.1} parent=1 // pred_check_branch
      %23 = sbr.rel (0) target = $region9
    $region8: #{alignment_loss.1} parent=1 // pred_region
      %s25 = ssub.s32 256, 256
      %26 = vsyncadd [#allocation6], %s25
      %s27 = sshll.u32 [#allocation5], 4
      %s28 = int_to_ptr.vmem [resolvable:$true] %s27
      %33 = dma.hbm_to_vmem [thread:$0]  %s1, 256, %s28, [#allocation6], 128, 128, 8
    $region9: #{alignment_loss.1} parent=1 // pred_fallthru
      _
    // Predicated region
    $region10: #{alignment_loss.1} parent=1 // pred_check
      _
    $region11: #{alignment_loss.1} parent=1 // pred_check_branch
      %35 = sbr.rel (0) target = $region13
    $region12: #{alignment_loss.1} parent=1 // pred_region
      %36 = dma.done [#allocation3], 256
    $region13: #{alignment_loss.1} parent=1 // pred_fallthru
      _
    // Predicated region
    $region14: #{alignment_loss.1} parent=1 // pred_check
      _
    $region15: #{alignment_loss.1} parent=1 // pred_check_branch
      %38 = sbr.rel (0) target = $region17
    $region16: #{alignment_loss.1} parent=1 // pred_region
      %39 = dma.done [#allocation6], 256
    $region17: #{alignment_loss.1} parent=1 // pred_fallthru
      _
    %v40 = vld [vmem:[#allocation2] sm:$0xff]
    %v41 = vld [vmem:[#allocation2 + $0x8] sm:$0xff]
    %v42 = vld [vmem:[#allocation5] sm:$0xff]
    %v43 = vld [vmem:[#allocation5 + $0x8] sm:$0xff]
    %v44 = vmul.f32 %v40, %v42
    %v45 = vmul.f32 %v41, %v43
    %vm46 = vcmask 261120
    %v47 = vsel %vm46, %v44, 0.0
    %48 = vadd.xlane.f32.xlu0 %v47
    %v49 = vpop.xlane.xlu0 %48
    %v50 = vsel %vm46, %v45, 0.0
    %51 = vadd.xlane.f32.xlu0 %v50
    %v52 = vpop.xlane.xlu0 %51
    %v53 = vmul.f32 %v40, %v40
    %v54 = vmul.f32 %v41, %v41
    %v55 = vsel %vm46, %v53, 0.0
    %56 = vadd.xlane.f32.xlu0 %v55
    %v57 = vpop.xlane.xlu0 %56
    %v58 = vsel %vm46, %v54, 0.0
    %59 = vadd.xlane.f32.xlu0 %v58
    %v60 = vpop.xlane.xlu0 %59
    %v61 = vmax.f32 %v57, 1e-24
    %v62 = vmax.f32 %v60, 1e-24
    %v63 = vrsqrt.pop %v61
    %v64 = vrsqrt.pop %v62
    %v65 = vmul.f32 %v42, %v42
    %v66 = vmul.f32 %v43, %v43
    %v67 = vsel %vm46, %v65, 0.0
    %68 = vadd.xlane.f32.xlu0 %v67
    %v69 = vpop.xlane.xlu0 %68
    %v70 = vsel %vm46, %v66, 0.0
    %71 = vadd.xlane.f32.xlu0 %v70
    %v72 = vpop.xlane.xlu0 %71
    %v73 = vmax.f32 %v69, 1e-24
    %v74 = vmax.f32 %v72, 1e-24
    %v75 = vrsqrt.pop %v73
    %v76 = vrsqrt.pop %v74
    %v77 = vmul.f32 %v49, %v63
    %v78 = vmul.f32 %v52, %v64
    %v79 = vmul.f32 %v77, %v75
    %v80 = vmul.f32 %v78, %v76
    %v81 = vadd.f32 %v79, %v80
    %v82 = vrot.slane %v81, 4
    %v83 = vadd.f32 %v81, %v82
    %v84 = vrot.slane %v83, 2
    %v85 = vadd.f32 %v83, %v84
    %v86 = vrot.slane %v85, 1
    %v87 = vadd.f32 %v85, %v86
    %vm88 = vcmask 0
    %89 = vst.msk [vmem:[#allocation7] sm:$0x1] %vm88, %v87
    // Predicated region
    $region18: #{alignment_loss.1} parent=1 // pred_check
      _
    $region19: #{alignment_loss.1} parent=1 // pred_check_branch
      %91 = sbr.rel (0) target = $region21
    $region20: #{alignment_loss.1} parent=1 // pred_region
      %s93 = ssub.s32 16, 16
      %94 = vsyncadd [#allocation4], %s93
      %s96 = sshll.u32 [#allocation7], 4
      %s97 = int_to_ptr.vmem [resolvable:$true] %s96
      %99 = dma.vmem_to_hbm [thread:$0]  %s97, 16, %s2, [#allocation4]
    $region21: #{alignment_loss.1} parent=1 // pred_fallthru
      _
    // Predicated region
    $region22: #{alignment_loss.1} parent=1 // pred_check
      _
    $region23: #{alignment_loss.1} parent=1 // pred_check_branch
      %101 = sbr.rel (0) target = $region25
    $region24: #{alignment_loss.1} parent=1 // pred_region
      %102 = dma.done [#allocation4], 16
    $region25: #{alignment_loss.1} parent=1 // pred_fallthru
      _
    %103 = vsyncpa [#allocation3], 1
    %104 = vsyncpa [#allocation6], 1
    %105 = vsyncpa [#allocation4], 1

</llo_original>
